<compile_context>
chip_gen: v7x
topology: tpu7x:2x2x1
jax: 0.10.0
libtpu: 0.0.40
codegen_flags: <defaults>
</compile_context>

<pallas_src>
import functools
import math

import jax
import jax.numpy as jnp
from jax.experimental import pallas as pl
from jax.experimental.pallas import tpu as pltpu


def _fusion_kernel(x_ref, ws_ref, bs_ref, wc_ref, bc_ref,
                   words_ref, scores_ref, *, fusion_threshold, bblk):
    _, S, Dp = x_ref.shape
    BS = bblk * S
    bs = bs_ref[0, 0]                                    # SMEM scalar bias

    # ---- index helpers: element id / within-element pos without int div ----
    def elem_id(idx):
        eid = jnp.zeros_like(idx)
        for j in range(1, bblk):                         # bblk is a small static int
            eid = eid + (idx >= j * S).astype(jnp.int32)
        return eid

    lane_i = jax.lax.broadcasted_iota(jnp.int32, (1, BS), 1)      # flat frame index
    eb = elem_id(lane_i) * S                                      # element base index
    t_in = lane_i - eb                                            # within-element t
    pair_valid = t_in < (S - 1)                                   # pair (t, t+1) exists

    row_k = jax.lax.broadcasted_iota(jnp.int32, (BS, BS), 0)
    col_t = jax.lax.broadcasted_iota(jnp.int32, (BS, BS), 1)
    same_elem = elem_id(row_k) == elem_id(col_t)
    # block-diagonal strict-upper matrix: exclusive prefix-sum within element
    upper_blk = jnp.logical_and(row_k < col_t, same_elem).astype(jnp.bfloat16)

    x_flat = x_ref[...].reshape(BS, Dp)                  # layout-preserving merge
    x_flat_bf = x_flat.astype(jnp.bfloat16)

    # ---- score_pair: ONE batched projection for the whole block ----
    ws = ws_ref[...]                                     # [2, Dp] f32
    yT = jax.lax.dot_general(ws, x_flat, (((1,), (1,)), ((), ())),
                             preferred_element_type=jnp.float32)   # [2, BS]
    y0 = yT[0:1, :]                                      # ws[0] . x[b, t]
    y1 = yT[1:2, :]                                      # ws[1] . x[b, t]
    if BS % 128 == 0:
        # production path: XLU lane rotate, no S^2 constant, no extra matmul
        y_next = pltpu.roll(y1, shift=-1, axis=-1)
    else:
        # tiny-shape fallback: exact shift matrix (wrapped lane is masked anyway)
        shift_m = (row_k == col_t + 1).astype(jnp.float32)
        y_next = jnp.dot(y1, shift_m, preferred_element_type=jnp.float32)
    scores = y0 + y_next + bs                            # [1, BS] f32; invalid lanes masked
    scores_ref[...] = jnp.where(pair_valid, scores, 0.0).reshape(
        scores_ref.shape).astype(scores_ref.dtype)       # single dense lane-wide store

    # ---- pair_to_fuse + per-frame segment id (ONE prefix-sum matmul) ----
    fuse = jnp.logical_and(scores > fusion_threshold, pair_valid)
    not_fuse = jnp.where(fuse, 0.0, 1.0).astype(jnp.bfloat16)      # word boundaries
    seg = jnp.dot(not_fuse, upper_blk,
                  preferred_element_type=jnp.float32)              # [1, BS] exact ints
    seg_gi = seg.astype(jnp.int32) + eb                            # global word slot id

    # ---- block-diagonal one-hot + ONE pooling matmul ----
    onehot = row_k == seg_gi                                       # [BS(word), BS(frame)]
    onehot_bf = onehot.astype(jnp.bfloat16)
    counts = jnp.sum(onehot.astype(jnp.float32), axis=1, keepdims=True)   # XLU reduce
    inv_cnt = pl.reciprocal(jnp.maximum(counts, 1.0), approx=True)        # EUP slot
    sums = jnp.dot(onehot_bf, x_flat_bf,
                   preferred_element_type=jnp.float32)                    # [BS, Dp]
    means = sums * inv_cnt                                                # segment mean

    # ---- combine_model: ONE stacked Linear(Dp, Dp) over every word slot ----
    proj = jnp.dot(means.astype(jnp.bfloat16), wc_ref[...],
                   preferred_element_type=jnp.float32) + bc_ref[...]
    out = jnp.where(counts > 0.0, proj, 0.0)             # zero the empty word slots
    words_ref[...] = out.reshape(bblk, S, Dp).astype(words_ref.dtype)


def word_speech_continuous_fusion(frame_input, params, fusion_threshold=0.5,
                                  block_b=None):
    """frame_input: [B, S, D] -> (word_reps [B, S, D] zero-padded,
                                  num_words [B] int32,
                                  pair_scores [B, S-1, 1])."""
    B, S, D = frame_input.shape
    ws, bs, wc, bc = params

    Dp = ((D + 127) // 128) * 128            # lane-dense feature dim
    if block_b is None:
        # >=2 grid steps so both v7x TensorCores get work; raise toward 16-32
        # on v5e/v6e (128 MiB VMEM) if B is large.
        block_b = max(1, min(8, B // 2)) if B >= 2 else 1
    Bp = ((B + block_b - 1) // block_b) * block_b
    G = Bp // block_b
    BS = block_b * S

    x = frame_input
    pad_d = Dp - D
    if Bp != B or pad_d:
        x = jnp.pad(x, ((0, Bp - B), (0, 0), (0, pad_d)))
    ws_p = jnp.pad(ws, ((0, 0), (0, pad_d))) if pad_d else ws
    wc_p = jnp.pad(wc, ((0, pad_d), (0, pad_d))) if pad_d else wc
    bc_p = jnp.pad(bc, ((0, 0), (0, pad_d))) if pad_d else bc
    wc_bf = wc_p.astype(jnp.bfloat16)        # pre-cast: halves weight DMA per step

    kernel = functools.partial(_fusion_kernel,
                               fusion_threshold=fusion_threshold, bblk=block_b)

    # Generation-aware VMEM budget: never below the estimate, capped at 75% of
    # the chip's physical VMEM (~48 MiB on v7x, ~96 MiB on v5e/v6e).
    try:
        vmem_cap = int(getattr(pltpu.get_tpu_info(), "vmem_capacity_bytes",
                               64 * 1024 * 1024))
    except Exception:
        vmem_cap = 64 * 1024 * 1024
    est = (16 * block_b * S * Dp                 # x + words blocks, f32, double-buffered
           + 16 * BS                             # scores blocks
           + 2 * (2 * Dp * 4 + Dp * Dp * 2 + Dp * 4)   # weights
           + 16 * BS * BS                        # iota / upper / shift / one-hot temps
           + 24 * BS * Dp)                       # flat f32/bf16 temporaries
    vmem_limit = int(min(max(2 * est, 32 * 1024 * 1024), int(0.75 * vmem_cap)))

    words, scores = pl.pallas_call(
        kernel,
        out_shape=(
            jax.ShapeDtypeStruct((Bp, S, Dp), frame_input.dtype),
            jax.ShapeDtypeStruct((G, 1, BS), jnp.float32),   # lane-dense scores slab
        ),
        grid=(G,),
        in_specs=[
            pl.BlockSpec((block_b, S, Dp), lambda g: (g, 0, 0)),      # x block
            pl.BlockSpec((2, Dp), lambda g: (0, 0)),                  # fused score weight
            pl.BlockSpec(memory_space=pltpu.MemorySpace.SMEM),        # score bias scalar
            pl.BlockSpec((Dp, Dp), lambda g: (0, 0)),                 # combine weight (bf16)
            pl.BlockSpec((1, Dp), lambda g: (0, 0)),                  # combine bias
        ],
        out_specs=(
            pl.BlockSpec((block_b, S, Dp), lambda g: (g, 0, 0)),
            pl.BlockSpec((1, 1, BS), lambda g: (g, 0, 0)),
        ),
        compiler_params=pltpu.CompilerParams(
            dimension_semantics=("parallel",),
            vmem_limit_bytes=vmem_limit),
    )(x, ws_p, bs, wc_bf, bc_p)

    words = words[:B, :, :D]
    scores_lane = scores.reshape(Bp, S)[:B, :S - 1]       # [B, S-1]
    pair_to_fuse = scores_lane > fusion_threshold
    num_words = (S - jnp.sum(pair_to_fuse, axis=-1)).astype(jnp.int32)
    return words, num_words, scores_lane[..., None]


def make_params(key, dim):
    """Deterministic synthetic parameters.
    score_model ~ Linear(2*dim, 1) as a fused (2, dim) weight (row 0 acts on
    frame t, row 1 on frame t+1); combine_model ~ Linear(dim, dim)."""
    k1, k2, k3, k4 = jax.random.split(key, 4)
    ws = jax.random.normal(k1, (2, dim), jnp.float32) * 0.3
    bs = jax.random.normal(k2, (1, 1), jnp.float32) * 0.1
    wc = jax.random.normal(k3, (dim, dim), jnp.float32) * (1.0 / math.sqrt(dim))
    bc = jax.random.normal(k4, (1, dim), jnp.float32) * 0.1
    return ws, bs, wc, bc


def _reference_forward(x, params, fuse):
    """Pure-JAX reference.  `fuse` is taken from the kernel's scores so that
    threshold ties cannot flip decisions between the two implementations."""
    ws, bs, wc, bc = params
    B, S, D = x.shape
    scores = (jnp.einsum("bsd,d->bs", x[:, :-1, :], ws[0])
              + jnp.einsum("bsd,d->bs", x[:, 1:, :], ws[1]) + bs[0, 0])
    not_fuse = 1.0 - fuse.astype(jnp.float32)                            # [B, S-1]
    seg = jnp.concatenate([jnp.zeros((B, 1), jnp.float32),
                           jnp.cumsum(not_fuse, axis=1)], axis=1)        # [B, S]
    w_ids = jnp.arange(S, dtype=jnp.float32)
    onehot = (seg[:, None, :] == w_ids[None, :, None]).astype(jnp.float32)
    counts = onehot.sum(-1, keepdims=True)
    sums = jnp.einsum("bwt,btd->bwd", onehot, x)
    mean = sums / jnp.maximum(counts, 1.0)
    proj = jnp.einsum("bwd,de->bwe", mean, wc) + bc[0]
    words = jnp.where(counts > 0, proj, 0.0)
    num_words = (S - fuse.sum(axis=-1)).astype(jnp.int32)
    return words, num_words, scores[..., None]


if __name__ == "__main__":
    B, S, D = 2, 8, 32
    key = jax.random.PRNGKey(0)
    kx, kp = jax.random.split(key)
    x = jax.random.normal(kx, (B, S, D), jnp.float32)
    params = make_params(kp, D)

    words, num_words, scores = word_speech_continuous_fusion(
        x, params, fusion_threshold=0.5)
    jax.block_until_ready((words, num_words, scores))

    assert words.shape == (B, S, D)
    assert num_words.shape == (B,)
    assert scores.shape == (B, S - 1, 1)

    # Sanity-check against a pure-JAX reference (loose tolerance: pooling and
    # combine matmuls feed the MXU in bf16, mean uses approx reciprocal).
    fuse = scores[..., 0] > 0.5
    ref_words, ref_nw, ref_scores = _reference_forward(x, params, fuse)
    assert jnp.allclose(scores, ref_scores, atol=1e-3, rtol=1e-3)
    assert jnp.array_equal(num_words, ref_nw)
    assert jnp.allclose(words, ref_words, atol=0.15, rtol=0.1)

    print("KERNEL_OK")
</pallas_src>

<mosaic_0001>
module attributes {stable_mosaic.version = 11 : i64} {
  func.func @_fusion_kernel(%arg0: i32, %arg1: memref<1x8x128xf32, #tpu.memory_space<vmem>>, %arg2: memref<2x128xf32, #tpu.memory_space<vmem>>, %arg3: memref<1x1xf32, #tpu.memory_space<smem>>, %arg4: memref<128x128xbf16, #tpu.memory_space<vmem>>, %arg5: memref<1x128xf32, #tpu.memory_space<vmem>>, %arg6: memref<1x8x128xf32, #tpu.memory_space<vmem>>, %arg7: memref<1x1x8xf32, #tpu.memory_space<vmem>>) attributes {dimension_semantics = [#tpu.dimension_semantics<parallel>], iteration_bounds = array<i64: 2>, scalar_prefetch = 0 : i64, scratch_operands = 0 : i64, tpu.core_type = #tpu.core_type<tc>, window_params = [{transform_indices = @transform_0, window_bounds = array<i64: 1, 8, 128>}, {pipeline_mode = #tpu.pipeline_mode<synchronous>, transform_indices = @transform_1, window_bounds = array<i64: 2, 128>}, {transform_indices = @transform_2, window_bounds = array<i64: 1, 1>}, {pipeline_mode = #tpu.pipeline_mode<synchronous>, transform_indices = @transform_3, window_bounds = array<i64: 128, 128>}, {pipeline_mode = #tpu.pipeline_mode<synchronous>, transform_indices = @transform_4, window_bounds = array<i64: 1, 128>}, {transform_indices = @transform_5, window_bounds = array<i64: 1, 8, 128>}, {transform_indices = @transform_6, window_bounds = array<i64: 1, 1, 8>}]} {
    %c0 = arith.constant 0 : index
    %c0_0 = arith.constant 0 : index
    %0 = memref.load %arg3[%c0, %c0_0] : memref<1x1xf32, #tpu.memory_space<smem>>
    %1 = tpu.iota {dimensions = array<i32: 1>} : vector<1x8xi32>
    %c0_i32 = arith.constant 0 : i32
    %2 = vector.broadcast %c0_i32 : i32 to vector<1x8xi32>
    %c8_i32 = arith.constant 8 : i32
    %3 = vector.broadcast %c8_i32 : i32 to vector<1x8xi32>
    %4 = arith.muli %2, %3 : vector<1x8xi32>
    %5 = arith.subi %1, %4 : vector<1x8xi32>
    %c7_i32 = arith.constant 7 : i32
    %6 = vector.broadcast %c7_i32 : i32 to vector<1x8xi32>
    %7 = arith.cmpi slt, %5, %6 : vector<1x8xi32>
    %8 = tpu.iota {dimensions = array<i32: 0>} : vector<8x8xi32>
    %9 = tpu.iota {dimensions = array<i32: 1>} : vector<8x8xi32>
    %c0_i32_1 = arith.constant 0 : i32
    %10 = vector.broadcast %c0_i32_1 : i32 to vector<8x8xi32>
    %c0_i32_2 = arith.constant 0 : i32
    %11 = vector.broadcast %c0_i32_2 : i32 to vector<8x8xi32>
    %12 = arith.cmpi eq, %10, %11 : vector<8x8xi32>
    %13 = arith.cmpi slt, %8, %9 : vector<8x8xi32>
    %14 = arith.andi %13, %12 : vector<8x8xi1>
    %15 = arith.extui %14 : vector<8x8xi1> to vector<8x8xi32>
    %16 = arith.sitofp %15 : vector<8x8xi32> to vector<8x8xf32>
    %17 = arith.truncf %16 : vector<8x8xf32> to vector<8x8xbf16>
    %c0_3 = arith.constant 0 : index
    %c0_4 = arith.constant 0 : index
    %c0_5 = arith.constant 0 : index
    %18 = vector.load %arg1[%c0_3, %c0_4, %c0_5] : memref<1x8x128xf32, #tpu.memory_space<vmem>>, vector<1x8x128xf32>
    %19 = vector.shape_cast %18 : vector<1x8x128xf32> to vector<8x128xf32>
    %20 = arith.truncf %19 : vector<8x128xf32> to vector<8x128xbf16>
    %c0_6 = arith.constant 0 : index
    %c0_7 = arith.constant 0 : index
    %21 = vector.load %arg2[%c0_6, %c0_7] : memref<2x128xf32, #tpu.memory_space<vmem>>, vector<2x128xf32>
    %cst = arith.constant dense<0.000000e+00> : vector<2x8xf32>
    %22 = tpu.matmul %21, %19, %cst {dimension_numbers = #tpu.dot_dimension_numbers<[1], [1], [0], [0], [0, 0, 1, 0], [], []>} : vector<2x128xf32>, vector<8x128xf32>, vector<2x8xf32> -> vector<2x8xf32>
    %23 = vector.extract_strided_slice %22 {offsets = [0, 0], sizes = [1, 8], strides = [1, 1]} : vector<2x8xf32> to vector<1x8xf32>
    %24 = vector.extract_strided_slice %22 {offsets = [1, 0], sizes = [1, 8], strides = [1, 1]} : vector<2x8xf32> to vector<1x8xf32>
    %c1_i32 = arith.constant 1 : i32
    %25 = vector.broadcast %c1_i32 : i32 to vector<8x8xi32>
    %26 = arith.addi %9, %25 : vector<8x8xi32>
    %27 = arith.cmpi eq, %8, %26 : vector<8x8xi32>
    %28 = arith.extui %27 : vector<8x8xi1> to vector<8x8xi32>
    %29 = arith.sitofp %28 : vector<8x8xi32> to vector<8x8xf32>
    %cst_8 = arith.constant dense<0.000000e+00> : vector<1x8xf32>
    %30 = tpu.matmul %24, %29, %cst_8 {dimension_numbers = #tpu.dot_dimension_numbers<[1], [0], [0], [1], [0, 0, 1, 1], [], []>} : vector<1x8xf32>, vector<8x8xf32>, vector<1x8xf32> -> vector<1x8xf32>
    %31 = arith.addf %23, %30 : vector<1x8xf32>
    %32 = vector.broadcast %0 : f32 to vector<1x8xf32>
    %33 = arith.addf %31, %32 : vector<1x8xf32>
    %cst_9 = arith.constant 0.000000e+00 : f32
    %34 = vector.broadcast %cst_9 : f32 to vector<1x8xf32>
    %35 = arith.select %7, %33, %34 : vector<1x8xi1>, vector<1x8xf32>
    %36 = vector.shape_cast %35 : vector<1x8xf32> to vector<1x1x8xf32>
    %c0_10 = arith.constant 0 : index
    %c0_11 = arith.constant 0 : index
    %c0_12 = arith.constant 0 : index
    %37 = vector.load %arg7[%c0_10, %c0_11, %c0_12] : memref<1x1x8xf32, #tpu.memory_space<vmem>>, vector<1x1x8xf32>
    tpu.vector_store %arg7[%c0_10, %c0_11, %c0_12], %36 {strides = array<i32>} : memref<1x1x8xf32, #tpu.memory_space<vmem>>, vector<1x1x8xf32>,
    %cst_13 = arith.constant 5.000000e-01 : f32
    %38 = vector.broadcast %cst_13 : f32 to vector<1x8xf32>
    %39 = arith.cmpf ogt, %33, %38 : vector<1x8xf32>
    %40 = arith.andi %39, %7 : vector<1x8xi1>
    %cst_14 = arith.constant 0.000000e+00 : f32
    %cst_15 = arith.constant 1.000000e+00 : f32
    %41 = vector.broadcast %cst_14 : f32 to vector<1x8xf32>
    %42 = vector.broadcast %cst_15 : f32 to vector<1x8xf32>
    %43 = arith.select %40, %41, %42 : vector<1x8xi1>, vector<1x8xf32>
    %44 = arith.truncf %43 : vector<1x8xf32> to vector<1x8xbf16>
    %cst_16 = arith.constant dense<0.000000e+00> : vector<1x8xf32>
    %45 = tpu.matmul %44, %17, %cst_16 {dimension_numbers = #tpu.dot_dimension_numbers<[1], [0], [0], [1], [0, 0, 1, 1], [], []>} : vector<1x8xbf16>, vector<8x8xbf16>, vector<1x8xf32> -> vector<1x8xf32>
    %46 = arith.fptosi %45 : vector<1x8xf32> to vector<1x8xi32>
    %47 = arith.addi %46, %4 : vector<1x8xi32>
    %48 = vector.broadcast %47 : vector<1x8xi32> to vector<8x8xi32>
    %49 = arith.cmpi eq, %8, %48 : vector<8x8xi32>
    %50 = arith.extui %49 : vector<8x8xi1> to vector<8x8xi32>
    %51 = arith.sitofp %50 : vector<8x8xi32> to vector<8x8xf32>
    %52 = arith.truncf %51 : vector<8x8xf32> to vector<8x8xbf16>
    %53 = arith.extui %49 : vector<8x8xi1> to vector<8x8xi32>
    %54 = arith.sitofp %53 : vector<8x8xi32> to vector<8x8xf32>
    %cst_17 = arith.constant dense<0.000000e+00> : vector<8xf32>
    %55 = vector.multi_reduction <add>, %54, %cst_17 [1] : vector<8x8xf32> to vector<8xf32>
    %56 = vector.shape_cast %55 : vector<8xf32> to vector<8x1xf32>
    %cst_18 = arith.constant 1.000000e+00 : f32
    %57 = vector.broadcast %cst_18 : f32 to vector<8x1xf32>
    %58 = arith.maximumf %56, %57 : vector<8x1xf32>
    %59 = tpu.reciprocal %58 {approx = true} : vector<8x1xf32> -> vector<8x1xf32>
    %cst_19 = arith.constant dense<0.000000e+00> : vector<8x128xf32>
    %60 = tpu.matmul %52, %20, %cst_19 {dimension_numbers = #tpu.dot_dimension_numbers<[1], [0], [0], [1], [0, 0, 1, 1], [], []>} : vector<8x8xbf16>, vector<8x128xbf16>, vector<8x128xf32> -> vector<8x128xf32>
    %61 = vector.broadcast %59 : vector<8x1xf32> to vector<8x128xf32>
    %62 = arith.mulf %60, %61 : vector<8x128xf32>
    %63 = arith.truncf %62 : vector<8x128xf32> to vector<8x128xbf16>
    %c0_20 = arith.constant 0 : index
    %c0_21 = arith.constant 0 : index
    %64 = vector.load %arg4[%c0_20, %c0_21] : memref<128x128xbf16, #tpu.memory_space<vmem>>, vector<128x128xbf16>
    %cst_22 = arith.constant dense<0.000000e+00> : vector<8x128xf32>
    %65 = tpu.matmul %63, %64, %cst_22 {dimension_numbers = #tpu.dot_dimension_numbers<[1], [0], [0], [1], [0, 0, 1, 1], [], []>} : vector<8x128xbf16>, vector<128x128xbf16>, vector<8x128xf32> -> vector<8x128xf32>
    %c0_23 = arith.constant 0 : index
    %c0_24 = arith.constant 0 : index
    %66 = vector.load %arg5[%c0_23, %c0_24] : memref<1x128xf32, #tpu.memory_space<vmem>>, vector<1x128xf32>
    %67 = vector.broadcast %66 : vector<1x128xf32> to vector<8x128xf32>
    %68 = arith.addf %65, %67 : vector<8x128xf32>
    %cst_25 = arith.constant 0.000000e+00 : f32
    %69 = vector.broadcast %cst_25 : f32 to vector<8x1xf32>
    %70 = arith.cmpf ogt, %56, %69 : vector<8x1xf32>
    %cst_26 = arith.constant 0.000000e+00 : f32
    %71 = vector.shape_cast %70 : vector<8x1xi1> to vector<8x1xi1>
    %72 = vector.broadcast %71 : vector<8x1xi1> to vector<8x128xi1>
    %73 = vector.broadcast %cst_26 : f32 to vector<8x128xf32>
    %74 = arith.select %72, %68, %73 : vector<8x128xi1>, vector<8x128xf32>
    %75 = vector.shape_cast %74 : vector<8x128xf32> to vector<1x8x128xf32>
    %c0_27 = arith.constant 0 : index
    %c0_28 = arith.constant 0 : index
    %c0_29 = arith.constant 0 : index
    %76 = vector.load %arg6[%c0_27, %c0_28, %c0_29] : memref<1x8x128xf32, #tpu.memory_space<vmem>>, vector<1x8x128xf32>
    tpu.vector_store %arg6[%c0_27, %c0_28, %c0_29], %75 {strides = array<i32>} : memref<1x8x128xf32, #tpu.memory_space<vmem>>, vector<1x8x128xf32>,
    return
  }
  func.func @transform_0(%arg0: i32) -> (i32, i32, i32) {
    %c0_i32 = arith.constant 0 : i32
    %c0_i32_0 = arith.constant 0 : i32
    %c0_i32_1 = arith.constant 0 : i32
    return %arg0, %c0_i32, %c0_i32_0 : i32, i32, i32
  }
  func.func @transform_1(%arg0: i32) -> (i32, i32) {
    %c0_i32 = arith.constant 0 : i32
    %c0_i32_0 = arith.constant 0 : i32
    %c0_i32_1 = arith.constant 0 : i32
    return %c0_i32, %c0_i32_0 : i32, i32
  }
  func.func @transform_2(%arg0: i32) -> (i32, i32) {
    %c0_i32 = arith.constant 0 : i32
    %c0_i32_0 = arith.constant 0 : i32
    %c0_i32_1 = arith.constant 0 : i32
    return %c0_i32, %c0_i32_0 : i32, i32
  }
  func.func @transform_3(%arg0: i32) -> (i32, i32) {
    %c0_i32 = arith.constant 0 : i32
    %c0_i32_0 = arith.constant 0 : i32
    %c0_i32_1 = arith.constant 0 : i32
    return %c0_i32, %c0_i32_0 : i32, i32
  }
  func.func @transform_4(%arg0: i32) -> (i32, i32) {
    %c0_i32 = arith.constant 0 : i32
    %c0_i32_0 = arith.constant 0 : i32
    %c0_i32_1 = arith.constant 0 : i32
    return %c0_i32, %c0_i32_0 : i32, i32
  }
  func.func @transform_5(%arg0: i32) -> (i32, i32, i32) {
    %c0_i32 = arith.constant 0 : i32
    %c0_i32_0 = arith.constant 0 : i32
    %c0_i32_1 = arith.constant 0 : i32
    return %arg0, %c0_i32, %c0_i32_0 : i32, i32, i32
  }
  func.func @transform_6(%arg0: i32) -> (i32, i32, i32) {
    %c0_i32 = arith.constant 0 : i32
    %c0_i32_0 = arith.constant 0 : i32
    %c0_i32_1 = arith.constant 0 : i32
    return %arg0, %c0_i32, %c0_i32_0 : i32, i32, i32
  }
}

</mosaic_0001>

<llo_original>
// kernel: tpu_custom_call.1
$region0: #{tpu_custom_call.1}
  #allocation0 [shape = 'u32[]', space=smem, size = 0x4, offset = 0x4, fixed_abs, tag = 'smem constant byte address 0x4 - core index']
  #allocation1 [shape = 'u32[144,128]{1,0:T(1,128)}', space=vmem, size = 0x12000, scoped, tag = 'internal scratch']
  #allocation2 [shape = 'f32[1,1]{1,0:T(1,128)S(6)}', space=smem, size = 0x200, scoped, tag = 'scoped memory for tpu_custom_call.1']
  %s0 = inlined_call_operand.hbm [shape: f32[2,8,128], index: 0, kind: input, shape index: {}]
  %s1 = inlined_call_operand.vmem [shape: f32[2,128], index: 1, kind: input, shape index: {}]
  %s2 = inlined_call_operand.<no memory space> [shape: f32[1,1], index: 2, kind: input, shape index: {}]
  %s3 = inlined_call_operand.hbm [shape: bf16[128,128], index: 3, kind: input, shape index: {}]
  %s4 = inlined_call_operand.vmem [shape: f32[1,128], index: 4, kind: input, shape index: {}]
  %s5 = inlined_call_operand.hbm [shape: f32[2,8,128], index: 5, kind: output, shape index: {0}]
  %s6 = inlined_call_operand.hbm [shape: f32[2,1,8], index: 6, kind: output, shape index: {1}]
  %7 = xla_tuple %s5, %s6
  %s8 = sld [smem:[#allocation0]]
  $region69: #{tpu_custom_call.1} parent=0
    _
  %s10 = ssub.s32 1, %s8
  %s11 = scalar_select 0, %s10, %s8
  %12 = sst [smem:[#allocation2]] %s2
  $region1: #{tpu_custom_call.1} parent=0
    #allocation3 [shape = 'u8[8192]{0}', space=vmem, size = 0x2000, scoped, tag = 'input window, operand 0']
    #allocation4 [shape = 's32[2]{0}', space=sflag, size = 0x8, scoped, tag = 'scoped memory for tpu_custom_call.1']
    #allocation5 [shape = 's32[2]{0}', space=sflag, size = 0x8, scoped, tag = 'scoped memory for tpu_custom_call.1']
    #allocation6 [shape = 'u8[32768]{0}', space=vmem, size = 0x8000, scoped, tag = 'input window, operand 3, single buffered']
    #allocation7 [shape = 's32[1]{0}', space=sflag, size = 0x4, scoped, tag = 'scoped memory for tpu_custom_call.1']
    #allocation8 [shape = 'u8[8192]{0}', space=vmem, size = 0x2000, scoped, tag = 'output window, operand 0']
    #allocation9 [shape = 'u8[1024]{0}', space=vmem, size = 0x400, scoped, tag = 'output window, operand 1']
    #allocation10 [shape = 's32[2]{0}', space=sflag, size = 0x8, scoped, tag = 'scoped memory for tpu_custom_call.1']
    %13 = vsyncpa [#allocation4], 0
    %s14 = scalar_lea.sflag [#allocation4], 1
    %15 = vsyncpa %s14, 0
    %16 = vsyncpa [#allocation7], 0
    %17 = vsyncpa [#allocation5], 0
    %s18 = scalar_lea.sflag [#allocation5], 1
    %19 = vsyncpa %s18, 0
    %20 = vsyncpa [#allocation10], 0
    %s21 = scalar_lea.sflag [#allocation10], 1
    %22 = vsyncpa %s21, 0
    loop: start=0, step=1, limit=4
    $region2: #{tpu_custom_call.1} parent=1 // loop_pre_header
      _
    $region3: #{tpu_custom_call.1} parent=1 // loop_header
      %s24 = sphi 0, %s28
      %p25 = scmp.ge.s32.totalorder %s24, 4
      %s34 = sphi 0, %s36
      %s37 = sphi 0, %s34
      %s38 = sphi 0, %s37
      %s54 = sphi 0, %s38
      %s58 = sphi 0, %s58
      %s60 = sphi 0, %s58
      %s61 = sphi 0, %s60
      %s75 = sphi 0, %s61
      %s79 = sphi 0, %s79
      %s81 = sphi 0, %s79
      %s82 = sphi 0, %s81
      %s96 = sphi 0, %s82
      %s100 = sphi 0, %s100
      %s102 = sphi 0, %s100
      %s103 = sphi 0, %s102
      %s117 = sphi 0, %s103
      %s121 = sphi 0, %s121
      %s123 = sphi 0, %s121
      %s124 = sphi 0, %s123
      %s138 = sphi 0, %s124
      %s144 = sphi 0, %s146
      %s147 = sphi 0, %s144
      %s148 = sphi 0, %s147
      %s164 = sphi 0, %s148
      %s170 = sphi 0, %s172
      %s173 = sphi 0, %s170
      %s174 = sphi 0, %s173
      %s190 = sphi 0, %s174
    $region4: #{tpu_custom_call.1} parent=1 // loop_header_branch
      %27 = sbr.rel (%p25) target = $region8
    $region5: #{tpu_custom_call.1} parent=1 // loop_body
      %s29 = ssub.s32 %s24, 1
      %s30 = ssub.s32 %s24, 2
      %s31 = sadd.s32 %s24, 1
      %s32 = ssub.s32 %s24, %s31
      %p33 = scmp.eq.s32.totalorder %s32, 0
      %s35 = sadd.s32 %s34, 1
      %s36 = scalar_select %p33, %s34, %s35
      %p39 = pneg %p33
      %p40 = scmp.eq.s32.totalorder %s24, 1
      %p41 = por %p39, %p40
      %p42 = scmp.ne.s32.totalorder %s34, %s37
      %p43 = scmp.eq.s32.totalorder %s24, 0
      %p44 = por %p42, %p43
      %p45 = scmp.ne.s32.totalorder %s34, %s37
      %p46 = scmp.eq.s32.totalorder %s29, 1
      %p47 = por %p45, %p46
      %p48 = scmp.ne.s32.totalorder %s37, %s38
      %p49 = scmp.eq.s32.totalorder %s29, 0
      %p50 = por %p48, %p49
      %p51 = scmp.ne.s32.totalorder %s37, %s38
      %p52 = scmp.eq.s32.totalorder %s30, 1
      %p53 = por %p51, %p52
      %p55 = scmp.ne.s32.totalorder %s38, %s54
      %p56 = scmp.eq.s32.totalorder %s30, 0
      %p57 = por %p55, %p56
      %s59 = sadd.s32 %s58, 1
      %p62 = scmp.eq.s32.totalorder %s24, 1
      %p63 = scmp.ne.s32.totalorder %s58, %s60
      %p64 = scmp.eq.s32.totalorder %s24, 0
      %p65 = por %p63, %p64
      %p66 = scmp.ne.s32.totalorder %s58, %s60
      %p67 = scmp.eq.s32.totalorder %s29, 1
      %p68 = por %p66, %p67
      %p69 = scmp.ne.s32.totalorder %s60, %s61
      %p70 = scmp.eq.s32.totalorder %s29, 0
      %p71 = por %p69, %p70
      %p72 = scmp.ne.s32.totalorder %s60, %s61
      %p73 = scmp.eq.s32.totalorder %s30, 1
      %p74 = por %p72, %p73
      %p76 = scmp.ne.s32.totalorder %s61, %s75
      %p77 = scmp.eq.s32.totalorder %s30, 0
      %p78 = por %p76, %p77
      %s80 = sadd.s32 %s79, 1
      %p83 = scmp.eq.s32.totalorder %s24, 1
      %p84 = scmp.ne.s32.totalorder %s79, %s81
      %p85 = scmp.eq.s32.totalorder %s24, 0
      %p86 = por %p84, %p85
      %p87 = scmp.ne.s32.totalorder %s79, %s81
      %p88 = scmp.eq.s32.totalorder %s29, 1
      %p89 = por %p87, %p88
      %p90 = scmp.ne.s32.totalorder %s81, %s82
      %p91 = scmp.eq.s32.totalorder %s29, 0
      %p92 = por %p90, %p91
      %p93 = scmp.ne.s32.totalorder %s81, %s82
      %p94 = scmp.eq.s32.totalorder %s30, 1
      %p95 = por %p93, %p94
      %p97 = scmp.ne.s32.totalorder %s82, %s96
      %p98 = scmp.eq.s32.totalorder %s30, 0
      %p99 = por %p97, %p98
      %s101 = sadd.s32 %s100, 1
      %p104 = scmp.eq.s32.totalorder %s24, 1
      %p105 = scmp.ne.s32.totalorder %s100, %s102
      %p106 = scmp.eq.s32.totalorder %s24, 0
      %p107 = por %p105, %p106
      %p108 = scmp.ne.s32.totalorder %s100, %s102
      %p109 = scmp.eq.s32.totalorder %s29, 1
      %p110 = por %p108, %p109
      %p111 = scmp.ne.s32.totalorder %s102, %s103
      %p112 = scmp.eq.s32.totalorder %s29, 0
      %p113 = por %p111, %p112
      %p114 = scmp.ne.s32.totalorder %s102, %s103
      %p115 = scmp.eq.s32.totalorder %s30, 1
      %p116 = por %p114, %p115
      %p118 = scmp.ne.s32.totalorder %s103, %s117
      %p119 = scmp.eq.s32.totalorder %s30, 0
      %p120 = por %p118, %p119
      %s122 = sadd.s32 %s121, 1
      %p125 = scmp.eq.s32.totalorder %s24, 1
      %p126 = scmp.ne.s32.totalorder %s121, %s123
      %p127 = scmp.eq.s32.totalorder %s24, 0
      %p128 = por %p126, %p127
      %p129 = scmp.ne.s32.totalorder %s121, %s123
      %p130 = scmp.eq.s32.totalorder %s29, 1
      %p131 = por %p129, %p130
      %p132 = scmp.ne.s32.totalorder %s123, %s124
      %p133 = scmp.eq.s32.totalorder %s29, 0
      %p134 = por %p132, %p133
      %p135 = scmp.ne.s32.totalorder %s123, %s124
      %p136 = scmp.eq.s32.totalorder %s30, 1
      %p137 = por %p135, %p136
      %p139 = scmp.ne.s32.totalorder %s124, %s138
      %p140 = scmp.eq.s32.totalorder %s30, 0
      %p141 = por %p139, %p140
      %s142 = ssub.s32 %s24, %s31
      %p143 = scmp.eq.s32.totalorder %s142, 0
      %s145 = sadd.s32 %s144, 1
      %s146 = scalar_select %p143, %s144, %s145
      %p149 = pneg %p143
      %p150 = scmp.eq.s32.totalorder %s24, 1
      %p151 = por %p149, %p150
      %p152 = scmp.ne.s32.totalorder %s144, %s147
      %p153 = scmp.eq.s32.totalorder %s24, 0
      %p154 = por %p152, %p153
      %p155 = scmp.ne.s32.totalorder %s144, %s147
      %p156 = scmp.eq.s32.totalorder %s29, 1
      %p157 = por %p155, %p156
      %p158 = scmp.ne.s32.totalorder %s147, %s148
      %p159 = scmp.eq.s32.totalorder %s29, 0
      %p160 = por %p158, %p159
      %p161 = scmp.ne.s32.totalorder %s147, %s148
      %p162 = scmp.eq.s32.totalorder %s30, 1
      %p163 = por %p161, %p162
      %p165 = scmp.ne.s32.totalorder %s148, %s164
      %p166 = scmp.eq.s32.totalorder %s30, 0
      %p167 = por %p165, %p166
      %s168 = ssub.s32 %s24, %s31
      %p169 = scmp.eq.s32.totalorder %s168, 0
      %s171 = sadd.s32 %s170, 1
      %s172 = scalar_select %p169, %s170, %s171
      %p175 = pneg %p169
      %p176 = scmp.eq.s32.totalorder %s24, 1
      %p177 = por %p175, %p176
      %p178 = scmp.ne.s32.totalorder %s170, %s173
      %p179 = scmp.eq.s32.totalorder %s24, 0
      %p180 = por %p178, %p179
      %p181 = scmp.ne.s32.totalorder %s170, %s173
      %p182 = scmp.eq.s32.totalorder %s29, 1
      %p183 = por %p181, %p182
      %p184 = scmp.ne.s32.totalorder %s173, %s174
      %p185 = scmp.eq.s32.totalorder %s29, 0
      %p186 = por %p184, %p185
      %p187 = scmp.ne.s32.totalorder %s173, %s174
      %p188 = scmp.eq.s32.totalorder %s30, 1
      %p189 = por %p187, %p188
      %p191 = scmp.ne.s32.totalorder %s174, %s190
      %p192 = scmp.eq.s32.totalorder %s30, 0
      %p193 = por %p191, %p192
      %p194 = scmp.le.s32.totalorder 1, %s24
      %p195 = scmp.lt.s32.totalorder %s24, 3
      %p196 = pnand %p194, %p195
      %p197 = pneg %p196
      // Predicated region
      $region9: #{tpu_custom_call.1} parent=5 // pred_check
        _
      $region10: #{tpu_custom_call.1} parent=5 // pred_check_branch
        %199 = sbr.rel (%p196) target = $region12
      $region11: #{tpu_custom_call.1} parent=5 // pred_region
        %s200 = ssub.s32 %s24, 1
        // Predicated region
        $region13: #{tpu_custom_call.1} parent=11 // pred_check
          %p201 = pneg %p71
        $region14: #{tpu_custom_call.1} parent=11 // pred_check_branch
          %203 = sbr.rel (%p201) target = $region16
        $region15: #{tpu_custom_call.1} parent=11 // pred_region
          _
        $region16: #{tpu_custom_call.1} parent=11 // pred_fallthru
          _
        // Predicated region
        $region17: #{tpu_custom_call.1} parent=11 // pred_check
          %p204 = pneg %p92
        $region18: #{tpu_custom_call.1} parent=11 // pred_check_branch
          %206 = sbr.rel (%p204) target = $region20
        $region19: #{tpu_custom_call.1} parent=11 // pred_region
          _
        $region20: #{tpu_custom_call.1} parent=11 // pred_fallthru
          _
        // Predicated region
        $region21: #{tpu_custom_call.1} parent=11 // pred_check
          %p207 = pneg %p113
        $region22: #{tpu_custom_call.1} parent=11 // pred_check_branch
          %209 = sbr.rel (%p207) target = $region24
        $region23: #{tpu_custom_call.1} parent=11 // pred_region
          %s211 = ssub.s32 1024, 1024
          %212 = vsyncadd [#allocation7], %s211
          %s213 = sshll.u32 [#allocation6], 4
          %s214 = int_to_ptr.vmem [resolvable:$true] %s213
          %219 = dma.hbm_to_vmem [thread:$0]  %s3, 1024, %s214, [#allocation7], 64, 64, 4
        $region24: #{tpu_custom_call.1} parent=11 // pred_fallthru
          _
        // Predicated region
        $region25: #{tpu_custom_call.1} parent=11 // pred_check
          %p220 = pneg %p134
        $region26: #{tpu_custom_call.1} parent=11 // pred_check_branch
          %222 = sbr.rel (%p220) target = $region28
        $region27: #{tpu_custom_call.1} parent=11 // pred_region
          _
        $region28: #{tpu_custom_call.1} parent=11 // pred_fallthru
          _
      $region12: #{tpu_custom_call.1} parent=5 // pred_fallthru
        _
      %p223 = scmp.lt.s32.totalorder %s24, 2
      // Predicated region
      $region29: #{tpu_custom_call.1} parent=5 // pred_check
        %p224 = pneg %p223
      $region30: #{tpu_custom_call.1} parent=5 // pred_check_branch
        %226 = sbr.rel (%p224) target = $region32
      $region31: #{tpu_custom_call.1} parent=5 // pred_region
        // Predicated region
        $region33: #{tpu_custom_call.1} parent=31 // pred_check
          %p227 = pneg %p44
        $region34: #{tpu_custom_call.1} parent=31 // pred_check_branch
          %229 = sbr.rel (%p227) target = $region36
        $region35: #{tpu_custom_call.1} parent=31 // pred_region
          %s230 = sand.u32 %s34, 1
          %s231 = scalar_lea.sflag [#allocation4], %s230
          %s232 = sand.u32 %s34, 1
          %s233 = smul.addr %s232, 8
          %s234 = scalar_lea.vmem [#allocation3], %s233
          %s236 = ssub.s32 128, 128
          %237 = vsyncadd %s231, %s236
          %s238 = smul.addr %s24, 128
          %s239 = scalar_lea.hbm %s0, %s238
          %s241 = sshll.u32 %s234, 4
          %s242 = int_to_ptr.vmem [resolvable:$true] %s241
          %244 = dma.hbm_to_vmem [thread:$0]  %s239, 128, %s242, %s231
        $region36: #{tpu_custom_call.1} parent=31 // pred_fallthru
          _
      $region32: #{tpu_custom_call.1} parent=5 // pred_fallthru
        _
      %p245 = scmp.le.s32.totalorder 1, %s24
      %p246 = scmp.lt.s32.totalorder %s24, 3
      %p247 = pnand %p245, %p246
      %p248 = pneg %p247
      // Predicated region
      $region37: #{tpu_custom_call.1} parent=5 // pred_check
        _
      $region38: #{tpu_custom_call.1} parent=5 // pred_check_branch
        %250 = sbr.rel (%p247) target = $region40
      $region39: #{tpu_custom_call.1} parent=5 // pred_region
        %s251 = ssub.s32 %s24, 1
        %s252 = sand.u32 %s37, 1
        %s253 = scalar_lea.sflag [#allocation4], %s252
        %s254 = sand.u32 %s37, 1
        %s255 = smul.addr %s254, 8
        %s256 = scalar_lea.vmem [#allocation3], %s255
        // Predicated region
        $region41: #{tpu_custom_call.1} parent=39 // pred_check
          %p257 = pneg %p50
        $region42: #{tpu_custom_call.1} parent=39 // pred_check_branch
          %259 = sbr.rel (%p257) target = $region44
        $region43: #{tpu_custom_call.1} parent=39 // pred_region
          %260 = dma.done %s253, 128
        $region44: #{tpu_custom_call.1} parent=39 // pred_fallthru
          _
        // Predicated region
        $region45: #{tpu_custom_call.1} parent=39 // pred_check
          %p261 = pneg %p113
        $region46: #{tpu_custom_call.1} parent=39 // pred_check_branch
          %263 = sbr.rel (%p261) target = $region48
        $region47: #{tpu_custom_call.1} parent=39 // pred_region
          %264 = dma.done [#allocation7], 1024
        $region48: #{tpu_custom_call.1} parent=39 // pred_fallthru
          _
        %s265 = sand.u32 %s37, 1
        %s266 = scalar_lea.sflag [#allocation4], %s265
        %s267 = sand.u32 %s37, 1
        %s268 = smul.addr %s267, 8
        %s269 = scalar_lea.vmem [#allocation3], %s268
        %p270 = pneg %p50
        %p271 = pneg %p47
        %p272 = pneg %p71
        %p273 = pneg %p68
        %p274 = pneg %p92
        %p275 = pneg %p89
        %p276 = pneg %p113
        %p277 = pneg %p110
        %p278 = pneg %p134
        %p279 = pneg %p131
        %p280 = pneg %p160
        %p281 = pneg %p157
        %s282 = sand.u32 %s147, 1
        %s283 = scalar_lea.sflag [#allocation5], %s282
        %s284 = sand.u32 %s147, 1
        %s285 = smul.addr %s284, 8
        %s286 = scalar_lea.vmem [#allocation8], %s285
        %p287 = pneg %p186
        %p288 = pneg %p183
        %s289 = sand.u32 %s173, 1
        %s290 = scalar_lea.sflag [#allocation10], %s289
        %s291 = sand.u32 %s173, 1
        %s292 = scalar_lea.vmem [#allocation9], %s291
        %s294 = sld [smem:[#allocation2]]
        %v295 = vlaneseq
        %v296 = vand.u32 %v295, 127
        %vm297 = vcmp.lt.s32.totalorder %v296, 7
        %v298 = vlaneseq
        %v299 = vshrl.u32 %v298, 7
        %vm300 = vcmp.lt.s32.totalorder %v299, %v296
        %v301 = vsel %vm300, 1, 0
        %v302 = vcvt.s32.f32 %v301
        %v303 = vpack.c.bf16 %v302, %v302
        %v304 = vld [vmem:[%s256] sm:$0xff]
        %v305 = vpack.c.bf16 %v304, %v304
        %v306 = vld [vmem:[%s1] sm:$0x3]
        %307 = vmatprep.subr.mxu0 0.0
        %308 = vmatpush1.xpose.msra.mxu0 %v304
        %309 = vmatprep.subr.mxu0 0.0
        %310 = vmatpush1.xpose.msra.mxu0 0.0
        %311 = vmatprep.subr.mxu0 0.0
        %312 = vmatpush1.xpose.msra.mxu0 0.0
        %313 = vmatprep.subr.mxu0 0.0
        %314 = vmatpush1.xpose.msra.mxu0 0.0
        %315 = vmatprep.subr.mxu0 0.0
        %316 = vmatpush1.xpose.msra.mxu0 0.0
        %317 = vmatprep.subr.mxu0 0.0
        %318 = vmatpush1.xpose.msra.mxu0 0.0
        %319 = vmatprep.subr.mxu0 0.0
        %320 = vmatpush1.xpose.msra.mxu0 0.0
        %321 = vmatprep.subr.mxu0 0.0
        %322 = vmatpush1.xpose.msra.mxu0 0.0
        %323 = vmatprep.subr.mxu0 0.0
        %324 = vmatpush1.xpose.msra.mxu0 0.0
        %325 = vmatprep.subr.mxu0 0.0
        %326 = vmatpush1.xpose.msra.mxu0 0.0
        %327 = vmatprep.subr.mxu0 0.0
        %328 = vmatpush1.xpose.msra.mxu0 0.0
        %329 = vmatprep.subr.mxu0 0.0
        %330 = vmatpush1.xpose.msra.mxu0 0.0
        %331 = vmatprep.subr.mxu0 0.0
        %332 = vmatpush1.xpose.msra.mxu0 0.0
        %333 = vmatprep.subr.mxu0 0.0
        %334 = vmatpush1.xpose.msra.mxu0 0.0
        %335 = vmatprep.subr.mxu0 0.0
        %336 = vmatpush1.xpose.msra.mxu0 0.0
        %337 = vmatprep.subr.mxu0 0.0
        %338 = vmatpush1.xpose.msra.mxu0 0.0
        %339 = vmatprep.subr.mxu0 0.0
        %340 = vmatpush1.xpose.msra.mxu0 0.0
        %341 = vmatprep.subr.mxu0 0.0
        %342 = vmatpush1.xpose.msra.mxu0 0.0
        %343 = vmatprep.subr.mxu0 0.0
        %344 = vmatpush1.xpose.msra.mxu0 0.0
        %345 = vmatprep.subr.mxu0 0.0
        %346 = vmatpush1.xpose.msra.mxu0 0.0
        %347 = vmatprep.subr.mxu0 0.0
        %348 = vmatpush1.xpose.msra.mxu0 0.0
        %349 = vmatprep.subr.mxu0 0.0
        %350 = vmatpush1.xpose.msra.mxu0 0.0
        %351 = vmatprep.subr.mxu0 0.0
        %352 = vmatpush1.xpose.msra.mxu0 0.0
        %353 = vmatprep.subr.mxu0 0.0
        %354 = vmatpush1.xpose.msra.mxu0 0.0
        %355 = vmatprep.subr.mxu0 0.0
        %356 = vmatpush1.xpose.msra.mxu0 0.0
        %357 = vmatprep.subr.mxu0 0.0
        %358 = vmatpush1.xpose.msra.mxu0 0.0
        %359 = vmatprep.subr.mxu0 0.0
        %360 = vmatpush1.xpose.msra.mxu0 0.0
        %361 = vmatprep.subr.mxu0 0.0
        %362 = vmatpush1.xpose.msra.mxu0 0.0
        %363 = vmatprep.subr.mxu0 0.0
        %364 = vmatpush1.xpose.msra.mxu0 0.0
        %365 = vmatprep.subr.mxu0 0.0
        %366 = vmatpush1.xpose.msra.mxu0 0.0
        %367 = vmatprep.subr.mxu0 0.0
        %368 = vmatpush1.xpose.msra.mxu0 0.0
        %369 = vmatprep.subr.mxu0 0.0
        %370 = vmatpush1.xpose.msra.mxu0 0.0
        %371 = vmatprep.mubr.f32.mxu0 0.0
        %372 = vmatmul.mubr.f32.gmra.mrb[0].mxu0 %v306
        %v373 = vpop.f32.mrb[0].mxu0
        %v374 = vadd.f32 0.0, %v373
        %v375 = vpop.f32.mrb[0].mxu0
        %376 = vdwg.mxu0
        %v377 = vadd.s32 %v296, 1
        %vm378 = vcmp.eq.s32.totalorder %v299, %v377
        %v379 = vsel %vm378, 1, 0
        %v380 = vcvt.s32.f32 %v379
        %v382 = vrot.slane %v374, 1
        %vm383 = vcmask 64512
        %v384 = vsel %vm383, %v382, 0
        %386 = vmatprep.subr.mxu0 0.0
        %387 = vmatpush1.msra.mxu0 %v380
        %388 = vmatprep.subr.mxu0 0.0
        %389 = vmatpush1.msra.mxu0 0.0
        %390 = vmatprep.subr.mxu0 0.0
        %391 = vmatpush1.msra.mxu0 0.0
        %392 = vmatprep.subr.mxu0 0.0
        %393 = vmatpush1.msra.mxu0 0.0
        %394 = vmatprep.subr.mxu0 0.0
        %395 = vmatpush1.msra.mxu0 0.0
        %396 = vmatprep.subr.mxu0 0.0
        %397 = vmatpush1.msra.mxu0 0.0
        %398 = vmatprep.subr.mxu0 0.0
        %399 = vmatpush1.msra.mxu0 0.0
        %400 = vmatprep.subr.mxu0 0.0
        %401 = vmatpush1.msra.mxu0 0.0
        %402 = vmatprep.subr.mxu0 0.0
        %403 = vmatpush1.msra.mxu0 0.0
        %404 = vmatprep.subr.mxu0 0.0
        %405 = vmatpush1.msra.mxu0 0.0
        %406 = vmatprep.subr.mxu0 0.0
        %407 = vmatpush1.msra.mxu0 0.0
        %408 = vmatprep.subr.mxu0 0.0
        %409 = vmatpush1.msra.mxu0 0.0
        %410 = vmatprep.subr.mxu0 0.0
        %411 = vmatpush1.msra.mxu0 0.0
        %412 = vmatprep.subr.mxu0 0.0
        %413 = vmatpush1.msra.mxu0 0.0
        %414 = vmatprep.subr.mxu0 0.0
        %415 = vmatpush1.msra.mxu0 0.0
        %416 = vmatprep.subr.mxu0 0.0
        %417 = vmatpush1.msra.mxu0 0.0
        %418 = vmatprep.subr.mxu0 0.0
        %419 = vmatpush1.msra.mxu0 0.0
        %420 = vmatprep.subr.mxu0 0.0
        %421 = vmatpush1.msra.mxu0 0.0
        %422 = vmatprep.subr.mxu0 0.0
        %423 = vmatpush1.msra.mxu0 0.0
        %424 = vmatprep.subr.mxu0 0.0
        %425 = vmatpush1.msra.mxu0 0.0
        %426 = vmatprep.subr.mxu0 0.0
        %427 = vmatpush1.msra.mxu0 0.0
        %428 = vmatprep.subr.mxu0 0.0
        %429 = vmatpush1.msra.mxu0 0.0
        %430 = vmatprep.subr.mxu0 0.0
        %431 = vmatpush1.msra.mxu0 0.0
        %432 = vmatprep.subr.mxu0 0.0
        %433 = vmatpush1.msra.mxu0 0.0
        %434 = vmatprep.subr.mxu0 0.0
        %435 = vmatpush1.msra.mxu0 0.0
        %436 = vmatprep.subr.mxu0 0.0
        %437 = vmatpush1.msra.mxu0 0.0
        %438 = vmatprep.subr.mxu0 0.0
        %439 = vmatpush1.msra.mxu0 0.0
        %440 = vmatprep.subr.mxu0 0.0
        %441 = vmatpush1.msra.mxu0 0.0
        %442 = vmatprep.subr.mxu0 0.0
        %443 = vmatpush1.msra.mxu0 0.0
        %444 = vmatprep.subr.mxu0 0.0
        %445 = vmatpush1.msra.mxu0 0.0
        %446 = vmatprep.subr.mxu0 0.0
        %447 = vmatpush1.msra.mxu0 0.0
        %448 = vmatprep.subr.mxu0 0.0
        %449 = vmatpush1.msra.mxu0 0.0
        %450 = vmatprep.mubr.f32.mxu0 0.0
        %451 = vmatmul.mubr.f32.gmra.mrb[0].mxu0 %v384
        %v452 = vpop.f32.mrb[0].mxu0
        %v453 = vadd.f32 0.0, %v452
        %v454 = vpop.f32.mrb[0].mxu0
        %455 = vdwg.mxu0
        %v456 = vadd.f32 %v374, %v453
        %v457 = vstv %s294
        %v458 = vadd.f32 %v456, %v457
        %v459 = vsel %vm297, %v458, 0.0
        %vm460 = vcmask 57344
        %461 = vst.msk [vmem:[%s292] sm:$0x1] %vm460, %v459
        %vm462 = vcmp.gt.f32.partialorder %v458, 0.5
        %vm463 = vmand %vm462, %vm297
        %v464 = vsel %vm463, 0.0, 1.0
        %v465 = vpack.c.bf16 %v464, %v464
        %v467 = vsel %vm383, %v465, 0
        %vm469 = vcmask 1043456
        %v471 = vsel %vm469, %v303, 0
        %473 = vmatprep.subr.bf16.mxu0 0
        %474 = vmatpush1.bf16.msra.mxu0 %v471
        %475 = vmatprep.subr.bf16.mxu0 0
        %476 = vmatpush1.bf16.msra.mxu0 0
        %477 = vmatprep.subr.bf16.mxu0 0
        %478 = vmatpush1.bf16.msra.mxu0 0
        %479 = vmatprep.subr.bf16.mxu0 0
        %480 = vmatpush1.bf16.msra.mxu0 0
        %481 = vmatprep.subr.bf16.mxu0 0
        %482 = vmatpush1.bf16.msra.mxu0 0
        %483 = vmatprep.subr.bf16.mxu0 0
        %484 = vmatpush1.bf16.msra.mxu0 0
        %485 = vmatprep.subr.bf16.mxu0 0
        %486 = vmatpush1.bf16.msra.mxu0 0
        %487 = vmatprep.subr.bf16.mxu0 0
        %488 = vmatpush1.bf16.msra.mxu0 0
        %489 = vmatprep.subr.bf16.mxu0 0
        %490 = vmatpush1.bf16.msra.mxu0 0
        %491 = vmatprep.subr.bf16.mxu0 0
        %492 = vmatpush1.bf16.msra.mxu0 0
        %493 = vmatprep.subr.bf16.mxu0 0
        %494 = vmatpush1.bf16.msra.mxu0 0
        %495 = vmatprep.subr.bf16.mxu0 0
        %496 = vmatpush1.bf16.msra.mxu0 0
        %497 = vmatprep.subr.bf16.mxu0 0
        %498 = vmatpush1.bf16.msra.mxu0 0
        %499 = vmatprep.subr.bf16.mxu0 0
        %500 = vmatpush1.bf16.msra.mxu0 0
        %501 = vmatprep.subr.bf16.mxu0 0
        %502 = vmatpush1.bf16.msra.mxu0 0
        %503 = vmatprep.subr.bf16.mxu0 0
        %504 = vmatpush1.bf16.msra.mxu0 0
        %505 = vmatprep.mubr.bf16.mxu0 0
        %506 = vmatmul.mubr.bf16.gmra.mrb[0].mxu0 %v467
        %v507 = vpop.f32.mrb[0].mxu0
        %v508 = vadd.f32 0.0, %v507
        %v509 = vpop.f32.mrb[0].mxu0
        %v510 = vpop.f32.mrb[0].mxu0
        %v511 = vpop.f32.mrb[0].mxu0
        %512 = vdwg.mxu0
        %v513 = vcvt.f32.s32.to.zero.pseudo %v508
        %v514 = vlaneseq
        %v515 = vshrl.u32 %v514, 7
        %v516 = vsub.s32 0, %v515
        %v517 = vrot.slane %v513, %v516
        %vm518 = vcmp.eq.s32.totalorder %v299, %v517
        %v519 = vsel %vm518, 1, 0
        %v520 = vcvt.s32.f32 %v519
        %v521 = vpack.c.bf16 %v520, %v520
        %v522 = vsel %vm383, %v520, 0.0
        %523 = vadd.xlane.f32.xlu0 %v522
        %v524 = vpop.xlane.xlu0 %523
        %v525 = vmax.f32 %v524, 1.0
        %v526 = vrcp.pop %v525
        %v528 = vsel %vm383, %v521, 0
        %v531 = vsel %vm469, %v305, 0
        %533 = vmatprep.subr.bf16.mxu0 0
        %534 = vmatpush1.bf16.msra.mxu0 %v531
        %535 = vmatprep.subr.bf16.mxu0 0
        %536 = vmatpush1.bf16.msra.mxu0 0
        %537 = vmatprep.subr.bf16.mxu0 0
        %538 = vmatpush1.bf16.msra.mxu0 0
        %539 = vmatprep.subr.bf16.mxu0 0
        %540 = vmatpush1.bf16.msra.mxu0 0
        %541 = vmatprep.subr.bf16.mxu0 0
        %542 = vmatpush1.bf16.msra.mxu0 0
        %543 = vmatprep.subr.bf16.mxu0 0
        %544 = vmatpush1.bf16.msra.mxu0 0
        %545 = vmatprep.subr.bf16.mxu0 0
        %546 = vmatpush1.bf16.msra.mxu0 0
        %547 = vmatprep.subr.bf16.mxu0 0
        %548 = vmatpush1.bf16.msra.mxu0 0
        %549 = vmatprep.subr.bf16.mxu0 0
        %550 = vmatpush1.bf16.msra.mxu0 0
        %551 = vmatprep.subr.bf16.mxu0 0
        %552 = vmatpush1.bf16.msra.mxu0 0
        %553 = vmatprep.subr.bf16.mxu0 0
        %554 = vmatpush1.bf16.msra.mxu0 0
        %555 = vmatprep.subr.bf16.mxu0 0
        %556 = vmatpush1.bf16.msra.mxu0 0
        %557 = vmatprep.subr.bf16.mxu0 0
        %558 = vmatpush1.bf16.msra.mxu0 0
        %559 = vmatprep.subr.bf16.mxu0 0
        %560 = vmatpush1.bf16.msra.mxu0 0
        %561 = vmatprep.subr.bf16.mxu0 0
        %562 = vmatpush1.bf16.msra.mxu0 0
        %563 = vmatprep.subr.bf16.mxu0 0
        %564 = vmatpush1.bf16.msra.mxu0 0
        %565 = vmatprep.mubr.bf16.mxu0 0
        %566 = vmatmul.mubr.bf16.gmra.mrb[0].mxu0 %v528
        %v567 = vpop.f32.mrb[0].mxu0
        %v568 = vadd.f32 0.0, %v567
        %v569 = vpop.f32.mrb[0].mxu0
        %v570 = vpop.f32.mrb[0].mxu0
        %v571 = vpop.f32.mrb[0].mxu0
        %572 = vdwg.mxu0
        %v573 = vmul.f32 %v568, %v526
        %v574 = vpack.c.bf16 %v573, %v573
        %v575 = vld [vmem:[#allocation6] sm:$0xf]
        %v576 = vld [vmem:[#allocation6 + $0x4] sm:$0xf]
        %v577 = vld [vmem:[#allocation6 + $0x8] sm:$0xf]
        %v578 = vld [vmem:[#allocation6 + $0xc] sm:$0xf]
        %v579 = vld [vmem:[#allocation6 + $0x10] sm:$0xf]
        %v580 = vld [vmem:[#allocation6 + $0x14] sm:$0xf]
        %v581 = vld [vmem:[#allocation6 + $0x18] sm:$0xf]
        %v582 = vld [vmem:[#allocation6 + $0x1c] sm:$0xf]
        %v583 = vld [vmem:[#allocation6 + $0x20] sm:$0xf]
        %v584 = vld [vmem:[#allocation6 + $0x24] sm:$0xf]
        %v585 = vld [vmem:[#allocation6 + $0x28] sm:$0xf]
        %v586 = vld [vmem:[#allocation6 + $0x2c] sm:$0xf]
        %v587 = vld [vmem:[#allocation6 + $0x30] sm:$0xf]
        %v588 = vld [vmem:[#allocation6 + $0x34] sm:$0xf]
        %v589 = vld [vmem:[#allocation6 + $0x38] sm:$0xf]
        %v590 = vld [vmem:[#allocation6 + $0x3c] sm:$0xf]
        %v591 = vld [vmem:[%s4] sm:$0x1]
        %v593 = vlaneseq
        %v594 = vshrl.u32 %v593, 7
        %v595 = vsub.s32 0, %v594
        %v596 = vrot.slane %v591, %v595
        %v614 = vunpack.c.l.b16 %v575
        %v615 = vunpack.c.l.b16 %v576
        %v616 = vunpack.c.l.b16 %v577
        %v617 = vunpack.c.l.b16 %v578
        %v618 = vunpack.c.l.b16 %v579
        %v619 = vunpack.c.l.b16 %v580
        %v620 = vunpack.c.l.b16 %v581
        %v621 = vunpack.c.l.b16 %v582
        %v622 = vunpack.c.l.b16 %v583
        %v623 = vunpack.c.l.b16 %v584
        %v624 = vunpack.c.l.b16 %v585
        %v625 = vunpack.c.l.b16 %v586
        %v626 = vunpack.c.l.b16 %v587
        %v627 = vunpack.c.l.b16 %v588
        %v628 = vunpack.c.l.b16 %v589
        %v629 = vunpack.c.l.b16 %v590
        %v630 = vpack.c.b16 %v615, %v614
        %v631 = vpack.c.b16 %v617, %v616
        %v632 = vpack.c.b16 %v619, %v618
        %v633 = vpack.c.b16 %v621, %v620
        %v634 = vpack.c.b16 %v623, %v622
        %v635 = vpack.c.b16 %v625, %v624
        %v636 = vpack.c.b16 %v627, %v626
        %v637 = vpack.c.b16 %v629, %v628
        %646 = vmatprep.subr.bf16.mxu0 0
        %647 = vmatpush1.bf16.msra.mxu0 %v630
        %648 = vmatprep.subr.bf16.mxu0 0
        %649 = vmatpush1.bf16.msra.mxu0 %v631
        %650 = vmatprep.subr.bf16.mxu0 0
        %651 = vmatpush1.bf16.msra.mxu0 %v632
        %652 = vmatprep.subr.bf16.mxu0 0
        %653 = vmatpush1.bf16.msra.mxu0 %v633
        %654 = vmatprep.subr.bf16.mxu0 0
        %655 = vmatpush1.bf16.msra.mxu0 %v634
        %656 = vmatprep.subr.bf16.mxu0 0
        %657 = vmatpush1.bf16.msra.mxu0 %v635
        %658 = vmatprep.subr.bf16.mxu0 0
        %659 = vmatpush1.bf16.msra.mxu0 %v636
        %660 = vmatprep.subr.bf16.mxu0 0
        %661 = vmatpush1.bf16.msra.mxu0 %v637
        %662 = vmatprep.subr.bf16.mxu0 0
        %663 = vmatpush1.bf16.msra.mxu0 0
        %664 = vmatprep.subr.bf16.mxu0 0
        %665 = vmatpush1.bf16.msra.mxu0 0
        %666 = vmatprep.subr.bf16.mxu0 0
        %667 = vmatpush1.bf16.msra.mxu0 0
        %668 = vmatprep.subr.bf16.mxu0 0
        %669 = vmatpush1.bf16.msra.mxu0 0
        %670 = vmatprep.subr.bf16.mxu0 0
        %671 = vmatpush1.bf16.msra.mxu0 0
        %672 = vmatprep.subr.bf16.mxu0 0
        %673 = vmatpush1.bf16.msra.mxu0 0
        %674 = vmatprep.subr.bf16.mxu0 0
        %675 = vmatpush1.bf16.msra.mxu0 0
        %676 = vmatprep.subr.bf16.mxu0 0
        %677 = vmatpush1.bf16.msra.mxu0 0
        %678 = vmatprep.mubr.bf16.mxu0 0
        %679 = vmatmul.mubr.bf16.gmra.mrb[0].mxu0 %v574
        %v680 = vpop.f32.mrb[0].mxu0
        %v681 = vadd.f32 %v596, %v680
        %v682 = vpop.f32.mrb[0].mxu0
        %v683 = vpop.f32.mrb[0].mxu0
        %v684 = vpop.f32.mrb[0].mxu0
        %685 = vdwg.mxu0
        %vm686 = vcmp.gt.f32.partialorder %v524, 0.0
        %v687 = vsel %vm686, 1, 0
        %vm688 = vcmp.eq.s32.totalorder %v687, 1
        %v689 = vsel %vm688, %v681, 0.0
        %690 = vst [vmem:[%s286] sm:$0xff] %v689
        %s691 = sand.u32 %s147, 1
        %s692 = scalar_lea.sflag [#allocation5], %s691
        %s693 = sand.u32 %s147, 1
        %s694 = smul.addr %s693, 8
        %s695 = scalar_lea.vmem [#allocation8], %s694
        %s696 = sand.u32 %s173, 1
        %s697 = scalar_lea.sflag [#allocation10], %s696
        %s698 = sand.u32 %s173, 1
        %s699 = scalar_lea.vmem [#allocation9], %s698
        // Predicated region
        $region49: #{tpu_custom_call.1} parent=39 // pred_check
          %p700 = pneg %p157
        $region50: #{tpu_custom_call.1} parent=39 // pred_check_branch
          %702 = sbr.rel (%p700) target = $region52
        $region51: #{tpu_custom_call.1} parent=39 // pred_region
          %s704 = ssub.s32 128, 128
          %705 = vsyncadd %s692, %s704
          %s706 = smul.addr %s29, 128
          %s707 = scalar_lea.hbm %s5, %s706
          %s709 = sshll.u32 %s695, 4
          %s710 = int_to_ptr.vmem [resolvable:$true] %s709
          %712 = dma.vmem_to_hbm [thread:$0]  %s710, 128, %s707, %s692
        $region52: #{tpu_custom_call.1} parent=39 // pred_fallthru
          _
        // Predicated region
        $region53: #{tpu_custom_call.1} parent=39 // pred_check
          %p713 = pneg %p183
        $region54: #{tpu_custom_call.1} parent=39 // pred_check_branch
          %715 = sbr.rel (%p713) target = $region56
        $region55: #{tpu_custom_call.1} parent=39 // pred_region
          %s717 = ssub.s32 16, 16
          %718 = vsyncadd %s697, %s717
          %s719 = smul.addr %s29, 16
          %s720 = scalar_lea.hbm %s6, %s719
          %s722 = sshll.u32 %s699, 4
          %s723 = int_to_ptr.vmem [resolvable:$true] %s722
          %725 = dma.vmem_to_hbm [thread:$0]  %s723, 16, %s720, %s697
        $region56: #{tpu_custom_call.1} parent=39 // pred_fallthru
          _
      $region40: #{tpu_custom_call.1} parent=5 // pred_fallthru
        _
      %p726 = scmp.le.s32.totalorder 2, %s24
      // Predicated region
      $region57: #{tpu_custom_call.1} parent=5 // pred_check
        %p727 = pneg %p726
      $region58: #{tpu_custom_call.1} parent=5 // pred_check_branch
        %729 = sbr.rel (%p727) target = $region60
      $region59: #{tpu_custom_call.1} parent=5 // pred_region
        %s730 = ssub.s32 %s24, 2
        // Predicated region
        $region61: #{tpu_custom_call.1} parent=59 // pred_check
          %p731 = pneg %p163
        $region62: #{tpu_custom_call.1} parent=59 // pred_check_branch
          %733 = sbr.rel (%p731) target = $region64
        $region63: #{tpu_custom_call.1} parent=59 // pred_region
          %s734 = sand.u32 %s148, 1
          %s735 = scalar_lea.sflag [#allocation5], %s734
          %s736 = sand.u32 %s148, 1
          %s737 = smul.addr %s736, 8
          %s738 = scalar_lea.vmem [#allocation8], %s737
          %739 = dma.done %s735, 128
        $region64: #{tpu_custom_call.1} parent=59 // pred_fallthru
          _
        // Predicated region
        $region65: #{tpu_custom_call.1} parent=59 // pred_check
          %p740 = pneg %p189
        $region66: #{tpu_custom_call.1} parent=59 // pred_check_branch
          %742 = sbr.rel (%p740) target = $region68
        $region67: #{tpu_custom_call.1} parent=59 // pred_region
          %s743 = sand.u32 %s174, 1
          %s744 = scalar_lea.sflag [#allocation10], %s743
          %s745 = sand.u32 %s174, 1
          %s746 = scalar_lea.vmem [#allocation9], %s745
          %747 = dma.done %s744, 16
        $region68: #{tpu_custom_call.1} parent=59 // pred_fallthru
          _
      $region60: #{tpu_custom_call.1} parent=5 // pred_fallthru
        _
    $region6: #{tpu_custom_call.1} parent=1 // loop_footer
      %s28 = sadd.s32 1, %s24
    $region7: #{tpu_custom_call.1} parent=1 // loop_footer_branch
      %23 = sbr.rel target = $region3
    $region8: #{tpu_custom_call.1} parent=1 // loop_exit
      _
    %748 = vsyncpa [#allocation4], 1
    %s749 = scalar_lea.sflag [#allocation4], 1
    %750 = vsyncpa %s749, 1
    %751 = vsyncpa [#allocation7], 1
    %752 = vsyncpa [#allocation5], 1
    %s753 = scalar_lea.sflag [#allocation5], 1
    %754 = vsyncpa %s753, 1
    %755 = vsyncpa [#allocation10], 1
    %s756 = scalar_lea.sflag [#allocation10], 1
    %757 = vsyncpa %s756, 1

</llo_original>
